<compile_context>
chip_gen: v7x
topology: tpu7x:2x2x1
jax: 0.10.0
libtpu: 0.0.40
codegen_flags: <defaults>
</compile_context>

<pallas_src>
import functools

import jax
import jax.numpy as jnp
from jax import lax
from jax.experimental import pallas as pl
from jax.experimental.pallas import tpu as pltpu


def _resblock_kernel(x_ref, w_ref, b_ref, out_ref, xrow_ref, col_ref, *,
                     res_scaling, W):
    # x_ref:    (1, C, H*W)        input block, channels-first, spatial flattened
    # w_ref:    (C, 9*C)           conv1 weight as (Cout, (dy, dx, Cin))
    # b_ref:    (C, 1)             conv1 bias
    # out_ref:  (1, C, H*W)
    # xrow_ref: (C, H*W + 2*guard) VMEM scratch: input with zero row-guards
    # col_ref:  (9*C, H*W)         VMEM scratch: im2col matrix
    _, C, HW = x_ref.shape
    guard = (xrow_ref.shape[1] - HW) // 2   # >= W + 1, 128-aligned (set by wrapper)

    x_val = x_ref[0]                                             # (C, HW)

    # Row-guarded copy of the input (guards stay zero -> rows y-1 / y+H read 0).
    # Re-zeroed every grid step: scratch is not zero-initialized and each
    # megacore core owns its own copy.
    xrow_ref[...] = jnp.zeros(xrow_ref.shape, xrow_ref.dtype)
    xrow_ref[:, guard:guard + HW] = x_val                        # lane-aligned store

    # x-coordinate of every output pixel, for masking the left/right halo.
    xcol = lax.broadcasted_iota(jnp.int32, (C, HW), 1) % W       # (C, HW)

    # im2col: col[(dy*3+dx)*C + cin, y*W + x] = x[cin, y+dy-1, x+dx-1] (0 outside).
    # A spatial shift by (dy-1, dx-1) is a shift by delta = (dy-1)*W + (dx-1) on
    # the flat H*W axis; out-of-range rows land in the zero guards, row-wrapped
    # columns are zeroed via the output-pixel x-coordinate mask.
    for dy in range(3):
        for dx in range(3):
            t = dy * 3 + dx
            delta = (dy - 1) * W + (dx - 1)
            start = guard + delta
            patch = xrow_ref[:, start:start + HW]                # (C, HW)
            if dx == 0:      # reads x-1: invalid at x == 0
                patch = jnp.where(xcol >= 1, patch, 0)
            elif dx == 2:    # reads x+1: invalid at x == W-1
                patch = jnp.where(xcol <= W - 2, patch, 0)
            col_ref[t * C:(t + 1) * C, :] = patch                # full-lane-width store

    # Single fused matmul, K = 9*C, f32 accumulation on the MXU.
    acc = jnp.dot(w_ref[...], col_ref[...],
                  preferred_element_type=jnp.float32)            # (C, HW) f32

    # Epilogue in f32: bias + ReLU + scaled residual (bias broadcast hoisted /
    # done exactly once).
    y = jnp.maximum(acc + b_ref[...].astype(jnp.float32), 0.0)

    # NOTE: original forward contains `y - self.conv2(y)` with no assignment, so
    # conv2 never affects the output; it is therefore not computed here.
    # TODO(synk): bn=True branch (BatchNorm2d) not implemented; EDSR uses bn=False.
    out = x_val.astype(jnp.float32) + res_scaling * y
    out_ref[...] = out[None].astype(out_ref.dtype)


def res_block_forward(x_nchw, w1, b1, w2, b2, *, res_scaling):
    """x_nchw: (N, C, H, W) (PyTorch layout). w1/w2: (Cout, Cin, 3, 3) OIHW. b1/b2: (C,)."""
    del w2, b2  # conv2 parameters exist in the module but its output is discarded.
    N, C, H, W = x_nchw.shape
    HW = H * W
    guard = ((W + 1 + 127) // 128) * 128    # zero row-guard, lane-aligned

    # Free (contiguous) reshape: channels-first with spatial flattened -> lane-dense.
    x_flat = x_nchw.reshape(N, C, HW)
    # Conv1 weight as a (Cout, 9*Cin) matrix, columns ordered (dy, dx, cin) to
    # match the in-kernel im2col.
    w_mat = jnp.transpose(w1, (0, 2, 3, 1)).reshape(C, 9 * C)

    kernel = functools.partial(_resblock_kernel, res_scaling=res_scaling, W=W)
    out_flat = pl.pallas_call(
        kernel,
        out_shape=jax.ShapeDtypeStruct((N, C, HW), x_nchw.dtype),
        grid_spec=pltpu.PrefetchScalarGridSpec(
            num_scalar_prefetch=0,
            grid=(N,),  # one image per step; "parallel" -> both v7x cores used
            in_specs=[
                pl.BlockSpec((1, C, HW), lambda n: (n, 0, 0)),
                pl.BlockSpec((C, 9 * C), lambda n: (0, 0)),
                pl.BlockSpec((C, 1), lambda n: (0, 0)),
            ],
            out_specs=pl.BlockSpec((1, C, HW), lambda n: (n, 0, 0)),
            scratch_shapes=[
                pltpu.VMEM((C, HW + 2 * guard), x_nchw.dtype),   # row-guarded input
                pltpu.VMEM((9 * C, HW), x_nchw.dtype),           # im2col matrix
            ],
        ),
        compiler_params=pltpu.CompilerParams(dimension_semantics=("parallel",)),
    )(x_flat, w_mat, b1.reshape(C, 1))
    return out_flat.reshape(N, C, H, W)


def _ref_forward(x_nchw, w1, b1, w2, b2, *, res_scaling):
    """Pure-JAX reference mirroring the PyTorch forward (including the discarded conv2)."""
    dn = ("NCHW", "OIHW", "NCHW")
    C = x_nchw.shape[1]
    y = lax.conv_general_dilated(x_nchw, w1, (1, 1), "SAME",
                                 dimension_numbers=dn) + b1.reshape(1, C, 1, 1)
    y = jnp.maximum(y, 0.0)
    _ = y - (lax.conv_general_dilated(y, w2, (1, 1), "SAME",
                                      dimension_numbers=dn) + b2.reshape(1, C, 1, 1))  # discarded
    return x_nchw + y * res_scaling


if __name__ == "__main__":
    N, C, H, W = 2, 4, 16, 16          # batch=2, feature_ch=4, spatial=16
    res_scaling = 0.1

    key = jax.random.PRNGKey(0)
    kx, kw1, kb1, kw2, kb2 = jax.random.split(key, 5)

    # PyTorch-style deterministic init (uniform(-1/sqrt(fan_in), 1/sqrt(fan_in))).
    fan_in = C * 3 * 3
    bound = 1.0 / (fan_in ** 0.5)
    x = jax.random.normal(kx, (N, C, H, W), jnp.float32)                  # NCHW (PyTorch layout)
    w1 = jax.random.uniform(kw1, (C, C, 3, 3), jnp.float32, -bound, bound)  # OIHW
    b1 = jax.random.uniform(kb1, (C,), jnp.float32, -bound, bound)
    w2 = jax.random.uniform(kw2, (C, C, 3, 3), jnp.float32, -bound, bound)  # OIHW
    b2 = jax.random.uniform(kb2, (C,), jnp.float32, -bound, bound)

    out = res_block_forward(x, w1, b1, w2, b2, res_scaling=res_scaling)
    out = jax.block_until_ready(out)

    ref = _ref_forward(x, w1, b1, w2, b2, res_scaling=res_scaling)
    assert out.shape == (N, C, H, W)
    assert jnp.allclose(out, ref, atol=1e-4, rtol=1e-4), "mismatch vs pure-JAX reference"

    print("KERNEL_OK")
</pallas_src>

<mosaic_0001>
module attributes {stable_mosaic.version = 11 : i64} {
  func.func @_resblock_kernel(%arg0: i32, %arg1: memref<1x4x256xf32, #tpu.memory_space<vmem>>, %arg2: memref<4x36xf32, #tpu.memory_space<vmem>>, %arg3: memref<4x1xf32, #tpu.memory_space<vmem>>, %arg4: memref<1x4x256xf32, #tpu.memory_space<vmem>>, %arg5: memref<4x512xf32, #tpu.memory_space<vmem>>, %arg6: memref<36x256xf32, #tpu.memory_space<vmem>>) attributes {dimension_semantics = [#tpu.dimension_semantics<parallel>], iteration_bounds = array<i64: 2>, scalar_prefetch = 0 : i64, scratch_operands = 2 : i64, tpu.core_type = #tpu.core_type<tc>, window_params = [{transform_indices = @transform_0, window_bounds = array<i64: 1, 4, 256>}, {pipeline_mode = #tpu.pipeline_mode<synchronous>, transform_indices = @transform_1, window_bounds = array<i64: 4, 36>}, {pipeline_mode = #tpu.pipeline_mode<synchronous>, transform_indices = @transform_2, window_bounds = array<i64: 4, 1>}, {transform_indices = @transform_3, window_bounds = array<i64: 1, 4, 256>}]} {
    %c0 = arith.constant 0 : index
    %c0_0 = arith.constant 0 : index
    %c0_1 = arith.constant 0 : index
    %0 = vector.load %arg1[%c0, %c0_0, %c0_1] : memref<1x4x256xf32, #tpu.memory_space<vmem>>, vector<1x4x256xf32>
    %1 = vector.shape_cast %0 : vector<1x4x256xf32> to vector<4x256xf32>
    %cst = arith.constant 0.000000e+00 : f32
    %2 = vector.broadcast %cst : f32 to vector<4x512xf32>
    %c0_2 = arith.constant 0 : index
    %c0_3 = arith.constant 0 : index
    %3 = vector.load %arg5[%c0_2, %c0_3] : memref<4x512xf32, #tpu.memory_space<vmem>>, vector<4x512xf32>
    tpu.vector_store %arg5[%c0_2, %c0_3], %2 {strides = array<i32>} : memref<4x512xf32, #tpu.memory_space<vmem>>, vector<4x512xf32>,
    %c0_4 = arith.constant 0 : index
    %c128 = arith.constant 128 : index
    %4 = vector.load %arg5[%c0_4, %c128] : memref<4x512xf32, #tpu.memory_space<vmem>>, vector<4x256xf32>
    tpu.vector_store %arg5[%c0_4, %c128], %1 {strides = array<i32>} : memref<4x512xf32, #tpu.memory_space<vmem>>, vector<4x256xf32>,
    %5 = tpu.iota {dimensions = array<i32: 1>} : vector<4x256xi32>
    %c16_i32 = arith.constant 16 : i32
    %c0_i32 = arith.constant 0 : i32
    %6 = arith.cmpi eq, %c16_i32, %c0_i32 : i32
    %c1_i32 = arith.constant 1 : i32
    %7 = arith.select %6, %c1_i32, %c16_i32 : i32
    %8 = vector.broadcast %7 : i32 to vector<4x256xi32>
    %9 = arith.remsi %5, %8 : vector<4x256xi32>
    %c0_i32_5 = arith.constant 0 : i32
    %10 = vector.broadcast %c0_i32_5 : i32 to vector<4x256xi32>
    %11 = arith.cmpi ne, %9, %10 : vector<4x256xi32>
    %c0_i32_6 = arith.constant 0 : i32
    %12 = vector.broadcast %c0_i32_6 : i32 to vector<4x256xi32>
    %13 = arith.cmpi slt, %9, %12 : vector<4x256xi32>
    %c0_i32_7 = arith.constant 0 : i32
    %14 = arith.cmpi slt, %7, %c0_i32_7 : i32
    %15 = vector.broadcast %14 : i1 to vector<4x256xi1>
    %16 = vector.broadcast %15 : vector<4x256xi1> to vector<4x256xi1>
    %17 = arith.xori %13, %16 : vector<4x256xi1>
    %18 = arith.andi %17, %11 : vector<4x256xi1>
    %19 = vector.broadcast %7 : i32 to vector<4x256xi32>
    %20 = arith.addi %9, %19 : vector<4x256xi32>
    %21 = arith.select %18, %20, %9 : vector<4x256xi1>, vector<4x256xi32>
    %c0_8 = arith.constant 0 : index
    %c111 = arith.constant 111 : index
    %22 = vector.load %arg5[%c0_8, %c111] : memref<4x512xf32, #tpu.memory_space<vmem>>, vector<4x256xf32>
    %c1_i32_9 = arith.constant 1 : i32
    %23 = vector.broadcast %c1_i32_9 : i32 to vector<4x256xi32>
    %24 = arith.cmpi sge, %21, %23 : vector<4x256xi32>
    %c0_i32_10 = arith.constant 0 : i32
    %25 = arith.sitofp %c0_i32_10 : i32 to f32
    %26 = vector.broadcast %25 : f32 to vector<4x256xf32>
    %27 = arith.select %24, %22, %26 : vector<4x256xi1>, vector<4x256xf32>
    %c0_11 = arith.constant 0 : index
    %c0_12 = arith.constant 0 : index
    %28 = vector.load %arg6[%c0_11, %c0_12] : memref<36x256xf32, #tpu.memory_space<vmem>>, vector<4x256xf32>
    tpu.vector_store %arg6[%c0_11, %c0_12], %27 {strides = array<i32>} : memref<36x256xf32, #tpu.memory_space<vmem>>, vector<4x256xf32>,
    %c0_13 = arith.constant 0 : index
    %c112 = arith.constant 112 : index
    %29 = vector.load %arg5[%c0_13, %c112] : memref<4x512xf32, #tpu.memory_space<vmem>>, vector<4x256xf32>
    %c4 = arith.constant 4 : index
    %c0_14 = arith.constant 0 : index
    %30 = vector.load %arg6[%c4, %c0_14] : memref<36x256xf32, #tpu.memory_space<vmem>>, vector<4x256xf32>
    tpu.vector_store %arg6[%c4, %c0_14], %29 {strides = array<i32>} : memref<36x256xf32, #tpu.memory_space<vmem>>, vector<4x256xf32>,
    %c0_15 = arith.constant 0 : index
    %c113 = arith.constant 113 : index
    %31 = vector.load %arg5[%c0_15, %c113] : memref<4x512xf32, #tpu.memory_space<vmem>>, vector<4x256xf32>
    %c14_i32 = arith.constant 14 : i32
    %32 = vector.broadcast %c14_i32 : i32 to vector<4x256xi32>
    %33 = arith.cmpi sle, %21, %32 : vector<4x256xi32>
    %c0_i32_16 = arith.constant 0 : i32
    %34 = arith.sitofp %c0_i32_16 : i32 to f32
    %35 = vector.broadcast %34 : f32 to vector<4x256xf32>
    %36 = arith.select %33, %31, %35 : vector<4x256xi1>, vector<4x256xf32>
    %c8 = arith.constant 8 : index
    %c0_17 = arith.constant 0 : index
    %37 = vector.load %arg6[%c8, %c0_17] : memref<36x256xf32, #tpu.memory_space<vmem>>, vector<4x256xf32>
    tpu.vector_store %arg6[%c8, %c0_17], %36 {strides = array<i32>} : memref<36x256xf32, #tpu.memory_space<vmem>>, vector<4x256xf32>,
    %c0_18 = arith.constant 0 : index
    %c127 = arith.constant 127 : index
    %38 = vector.load %arg5[%c0_18, %c127] : memref<4x512xf32, #tpu.memory_space<vmem>>, vector<4x256xf32>
    %c1_i32_19 = arith.constant 1 : i32
    %39 = vector.broadcast %c1_i32_19 : i32 to vector<4x256xi32>
    %40 = arith.cmpi sge, %21, %39 : vector<4x256xi32>
    %c0_i32_20 = arith.constant 0 : i32
    %41 = arith.sitofp %c0_i32_20 : i32 to f32
    %42 = vector.broadcast %41 : f32 to vector<4x256xf32>
    %43 = arith.select %40, %38, %42 : vector<4x256xi1>, vector<4x256xf32>
    %c12 = arith.constant 12 : index
    %c0_21 = arith.constant 0 : index
    %44 = vector.load %arg6[%c12, %c0_21] : memref<36x256xf32, #tpu.memory_space<vmem>>, vector<4x256xf32>
    tpu.vector_store %arg6[%c12, %c0_21], %43 {strides = array<i32>} : memref<36x256xf32, #tpu.memory_space<vmem>>, vector<4x256xf32>,
    %c0_22 = arith.constant 0 : index
    %c128_23 = arith.constant 128 : index
    %45 = vector.load %arg5[%c0_22, %c128_23] : memref<4x512xf32, #tpu.memory_space<vmem>>, vector<4x256xf32>
    %c16 = arith.constant 16 : index
    %c0_24 = arith.constant 0 : index
    %46 = vector.load %arg6[%c16, %c0_24] : memref<36x256xf32, #tpu.memory_space<vmem>>, vector<4x256xf32>
    tpu.vector_store %arg6[%c16, %c0_24], %45 {strides = array<i32>} : memref<36x256xf32, #tpu.memory_space<vmem>>, vector<4x256xf32>,
    %c0_25 = arith.constant 0 : index
    %c129 = arith.constant 129 : index
    %47 = vector.load %arg5[%c0_25, %c129] : memref<4x512xf32, #tpu.memory_space<vmem>>, vector<4x256xf32>
    %c14_i32_26 = arith.constant 14 : i32
    %48 = vector.broadcast %c14_i32_26 : i32 to vector<4x256xi32>
    %49 = arith.cmpi sle, %21, %48 : vector<4x256xi32>
    %c0_i32_27 = arith.constant 0 : i32
    %50 = arith.sitofp %c0_i32_27 : i32 to f32
    %51 = vector.broadcast %50 : f32 to vector<4x256xf32>
    %52 = arith.select %49, %47, %51 : vector<4x256xi1>, vector<4x256xf32>
    %c20 = arith.constant 20 : index
    %c0_28 = arith.constant 0 : index
    %53 = vector.load %arg6[%c20, %c0_28] : memref<36x256xf32, #tpu.memory_space<vmem>>, vector<4x256xf32>
    tpu.vector_store %arg6[%c20, %c0_28], %52 {strides = array<i32>} : memref<36x256xf32, #tpu.memory_space<vmem>>, vector<4x256xf32>,
    %c0_29 = arith.constant 0 : index
    %c143 = arith.constant 143 : index
    %54 = vector.load %arg5[%c0_29, %c143] : memref<4x512xf32, #tpu.memory_space<vmem>>, vector<4x256xf32>
    %c1_i32_30 = arith.constant 1 : i32
    %55 = vector.broadcast %c1_i32_30 : i32 to vector<4x256xi32>
    %56 = arith.cmpi sge, %21, %55 : vector<4x256xi32>
    %c0_i32_31 = arith.constant 0 : i32
    %57 = arith.sitofp %c0_i32_31 : i32 to f32
    %58 = vector.broadcast %57 : f32 to vector<4x256xf32>
    %59 = arith.select %56, %54, %58 : vector<4x256xi1>, vector<4x256xf32>
    %c24 = arith.constant 24 : index
    %c0_32 = arith.constant 0 : index
    %60 = vector.load %arg6[%c24, %c0_32] : memref<36x256xf32, #tpu.memory_space<vmem>>, vector<4x256xf32>
    tpu.vector_store %arg6[%c24, %c0_32], %59 {strides = array<i32>} : memref<36x256xf32, #tpu.memory_space<vmem>>, vector<4x256xf32>,
    %c0_33 = arith.constant 0 : index
    %c144 = arith.constant 144 : index
    %61 = vector.load %arg5[%c0_33, %c144] : memref<4x512xf32, #tpu.memory_space<vmem>>, vector<4x256xf32>
    %c28 = arith.constant 28 : index
    %c0_34 = arith.constant 0 : index
    %62 = vector.load %arg6[%c28, %c0_34] : memref<36x256xf32, #tpu.memory_space<vmem>>, vector<4x256xf32>
    tpu.vector_store %arg6[%c28, %c0_34], %61 {strides = array<i32>} : memref<36x256xf32, #tpu.memory_space<vmem>>, vector<4x256xf32>,
    %c0_35 = arith.constant 0 : index
    %c145 = arith.constant 145 : index
    %63 = vector.load %arg5[%c0_35, %c145] : memref<4x512xf32, #tpu.memory_space<vmem>>, vector<4x256xf32>
    %c14_i32_36 = arith.constant 14 : i32
    %64 = vector.broadcast %c14_i32_36 : i32 to vector<4x256xi32>
    %65 = arith.cmpi sle, %21, %64 : vector<4x256xi32>
    %c0_i32_37 = arith.constant 0 : i32
    %66 = arith.sitofp %c0_i32_37 : i32 to f32
    %67 = vector.broadcast %66 : f32 to vector<4x256xf32>
    %68 = arith.select %65, %63, %67 : vector<4x256xi1>, vector<4x256xf32>
    %c32 = arith.constant 32 : index
    %c0_38 = arith.constant 0 : index
    %69 = vector.load %arg6[%c32, %c0_38] : memref<36x256xf32, #tpu.memory_space<vmem>>, vector<4x256xf32>
    tpu.vector_store %arg6[%c32, %c0_38], %68 {strides = array<i32>} : memref<36x256xf32, #tpu.memory_space<vmem>>, vector<4x256xf32>,
    %c0_39 = arith.constant 0 : index
    %c0_40 = arith.constant 0 : index
    %70 = vector.load %arg2[%c0_39, %c0_40] : memref<4x36xf32, #tpu.memory_space<vmem>>, vector<4x36xf32>
    %c0_41 = arith.constant 0 : index
    %c0_42 = arith.constant 0 : index
    %71 = vector.load %arg6[%c0_41, %c0_42] : memref<36x256xf32, #tpu.memory_space<vmem>>, vector<36x256xf32>
    %cst_43 = arith.constant dense<0.000000e+00> : vector<4x256xf32>
    %72 = tpu.matmul %70, %71, %cst_43 {dimension_numbers = #tpu.dot_dimension_numbers<[1], [0], [0], [1], [0, 0, 1, 1], [], []>} : vector<4x36xf32>, vector<36x256xf32>, vector<4x256xf32> -> vector<4x256xf32>
    %c0_44 = arith.constant 0 : index
    %c0_45 = arith.constant 0 : index
    %73 = vector.load %arg3[%c0_44, %c0_45] : memref<4x1xf32, #tpu.memory_space<vmem>>, vector<4x1xf32>
    %74 = vector.broadcast %73 : vector<4x1xf32> to vector<4x256xf32>
    %75 = arith.addf %72, %74 : vector<4x256xf32>
    %cst_46 = arith.constant 0.000000e+00 : f32
    %76 = vector.broadcast %cst_46 : f32 to vector<4x256xf32>
    %77 = arith.maximumf %75, %76 : vector<4x256xf32>
    %cst_47 = arith.constant 1.000000e-01 : f32
    %78 = vector.broadcast %cst_47 : f32 to vector<4x256xf32>
    %79 = arith.mulf %78, %77 : vector<4x256xf32>
    %80 = arith.addf %1, %79 : vector<4x256xf32>
    %81 = vector.shape_cast %80 : vector<4x256xf32> to vector<1x4x256xf32>
    %c0_48 = arith.constant 0 : index
    %c0_49 = arith.constant 0 : index
    %c0_50 = arith.constant 0 : index
    %82 = vector.load %arg4[%c0_48, %c0_49, %c0_50] : memref<1x4x256xf32, #tpu.memory_space<vmem>>, vector<1x4x256xf32>
    tpu.vector_store %arg4[%c0_48, %c0_49, %c0_50], %81 {strides = array<i32>} : memref<1x4x256xf32, #tpu.memory_space<vmem>>, vector<1x4x256xf32>,
    return
  }
  func.func @transform_0(%arg0: i32) -> (i32, i32, i32) {
    %c0_i32 = arith.constant 0 : i32
    %c0_i32_0 = arith.constant 0 : i32
    %c0_i32_1 = arith.constant 0 : i32
    return %arg0, %c0_i32, %c0_i32_0 : i32, i32, i32
  }
  func.func @transform_1(%arg0: i32) -> (i32, i32) {
    %c0_i32 = arith.constant 0 : i32
    %c0_i32_0 = arith.constant 0 : i32
    %c0_i32_1 = arith.constant 0 : i32
    return %c0_i32, %c0_i32_0 : i32, i32
  }
  func.func @transform_2(%arg0: i32) -> (i32, i32) {
    %c0_i32 = arith.constant 0 : i32
    %c0_i32_0 = arith.constant 0 : i32
    %c0_i32_1 = arith.constant 0 : i32
    return %c0_i32, %c0_i32_0 : i32, i32
  }
  func.func @transform_3(%arg0: i32) -> (i32, i32, i32) {
    %c0_i32 = arith.constant 0 : i32
    %c0_i32_0 = arith.constant 0 : i32
    %c0_i32_1 = arith.constant 0 : i32
    return %arg0, %c0_i32, %c0_i32_0 : i32, i32, i32
  }
}

</mosaic_0001>

<llo_original>
// kernel: tpu_custom_call.1
$region0: #{tpu_custom_call.1}
  #allocation0 [shape = 'u32[]', space=smem, size = 0x4, offset = 0x4, fixed_abs, tag = 'smem constant byte address 0x4 - core index']
  #allocation1 [shape = 'u32[144,128]{1,0:T(1,128)}', space=vmem, size = 0x12000, scoped, tag = 'internal scratch']
  #allocation2 [shape = 'f32[4,512]{1,0:T(4,128)}', space=vmem, size = 0x2000, scoped, tag = 'scratch operand']
  #allocation3 [shape = 'f32[36,256]{1,0:T(8,128)}', space=vmem, size = 0xa000, scoped, tag = 'scratch operand']
  %s0 = inlined_call_operand.hbm [shape: f32[2,4,256], index: 0, kind: input, shape index: {}]
  %s1 = inlined_call_operand.vmem [shape: f32[4,36], index: 1, kind: input, shape index: {}]
  %s2 = inlined_call_operand.vmem [shape: f32[4,1], index: 2, kind: input, shape index: {}]
  %s3 = inlined_call_operand.hbm [shape: f32[2,4,256], index: 3, kind: output, shape index: {}]
  %s4 = sld [smem:[#allocation0]]
  $region49: #{tpu_custom_call.1} parent=0
    _
  %s6 = ssub.s32 1, %s4
  %s7 = scalar_select 0, %s6, %s4
  $region1: #{tpu_custom_call.1} parent=0
    #allocation4 [shape = 'u8[8192]{0}', space=vmem, size = 0x2000, scoped, tag = 'input window, operand 0']
    #allocation5 [shape = 's32[2]{0}', space=sflag, size = 0x8, scoped, tag = 'scoped memory for tpu_custom_call.1']
    #allocation6 [shape = 's32[2]{0}', space=sflag, size = 0x8, scoped, tag = 'scoped memory for tpu_custom_call.1']
    #allocation7 [shape = 'u8[8192]{0}', space=vmem, size = 0x2000, scoped, tag = 'output window, operand 0']
    %8 = vsyncpa [#allocation5], 0
    %s9 = scalar_lea.sflag [#allocation5], 1
    %10 = vsyncpa %s9, 0
    %11 = vsyncpa [#allocation6], 0
    %s12 = scalar_lea.sflag [#allocation6], 1
    %13 = vsyncpa %s12, 0
    loop: start=0, step=1, limit=4
    $region2: #{tpu_custom_call.1} parent=1 // loop_pre_header
      _
    $region3: #{tpu_custom_call.1} parent=1 // loop_header
      %s15 = sphi 0, %s19
      %p16 = scmp.ge.s32.totalorder %s15, 4
      %s25 = sphi 0, %s27
      %s28 = sphi 0, %s25
      %s29 = sphi 0, %s28
      %s45 = sphi 0, %s29
      %s49 = sphi 0, %s49
      %s51 = sphi 0, %s49
      %s52 = sphi 0, %s51
      %s66 = sphi 0, %s52
      %s70 = sphi 0, %s70
      %s72 = sphi 0, %s70
      %s73 = sphi 0, %s72
      %s87 = sphi 0, %s73
      %s93 = sphi 0, %s95
      %s96 = sphi 0, %s93
      %s97 = sphi 0, %s96
      %s113 = sphi 0, %s97
    $region4: #{tpu_custom_call.1} parent=1 // loop_header_branch
      %18 = sbr.rel (%p16) target = $region8
    $region5: #{tpu_custom_call.1} parent=1 // loop_body
      %s20 = ssub.s32 %s15, 1
      %s21 = ssub.s32 %s15, 2
      %s22 = sadd.s32 %s15, 1
      %s23 = ssub.s32 %s15, %s22
      %p24 = scmp.eq.s32.totalorder %s23, 0
      %s26 = sadd.s32 %s25, 1
      %s27 = scalar_select %p24, %s25, %s26
      %p30 = pneg %p24
      %p31 = scmp.eq.s32.totalorder %s15, 1
      %p32 = por %p30, %p31
      %p33 = scmp.ne.s32.totalorder %s25, %s28
      %p34 = scmp.eq.s32.totalorder %s15, 0
      %p35 = por %p33, %p34
      %p36 = scmp.ne.s32.totalorder %s25, %s28
      %p37 = scmp.eq.s32.totalorder %s20, 1
      %p38 = por %p36, %p37
      %p39 = scmp.ne.s32.totalorder %s28, %s29
      %p40 = scmp.eq.s32.totalorder %s20, 0
      %p41 = por %p39, %p40
      %p42 = scmp.ne.s32.totalorder %s28, %s29
      %p43 = scmp.eq.s32.totalorder %s21, 1
      %p44 = por %p42, %p43
      %p46 = scmp.ne.s32.totalorder %s29, %s45
      %p47 = scmp.eq.s32.totalorder %s21, 0
      %p48 = por %p46, %p47
      %s50 = sadd.s32 %s49, 1
      %p53 = scmp.eq.s32.totalorder %s15, 1
      %p54 = scmp.ne.s32.totalorder %s49, %s51
      %p55 = scmp.eq.s32.totalorder %s15, 0
      %p56 = por %p54, %p55
      %p57 = scmp.ne.s32.totalorder %s49, %s51
      %p58 = scmp.eq.s32.totalorder %s20, 1
      %p59 = por %p57, %p58
      %p60 = scmp.ne.s32.totalorder %s51, %s52
      %p61 = scmp.eq.s32.totalorder %s20, 0
      %p62 = por %p60, %p61
      %p63 = scmp.ne.s32.totalorder %s51, %s52
      %p64 = scmp.eq.s32.totalorder %s21, 1
      %p65 = por %p63, %p64
      %p67 = scmp.ne.s32.totalorder %s52, %s66
      %p68 = scmp.eq.s32.totalorder %s21, 0
      %p69 = por %p67, %p68
      %s71 = sadd.s32 %s70, 1
      %p74 = scmp.eq.s32.totalorder %s15, 1
      %p75 = scmp.ne.s32.totalorder %s70, %s72
      %p76 = scmp.eq.s32.totalorder %s15, 0
      %p77 = por %p75, %p76
      %p78 = scmp.ne.s32.totalorder %s70, %s72
      %p79 = scmp.eq.s32.totalorder %s20, 1
      %p80 = por %p78, %p79
      %p81 = scmp.ne.s32.totalorder %s72, %s73
      %p82 = scmp.eq.s32.totalorder %s20, 0
      %p83 = por %p81, %p82
      %p84 = scmp.ne.s32.totalorder %s72, %s73
      %p85 = scmp.eq.s32.totalorder %s21, 1
      %p86 = por %p84, %p85
      %p88 = scmp.ne.s32.totalorder %s73, %s87
      %p89 = scmp.eq.s32.totalorder %s21, 0
      %p90 = por %p88, %p89
      %s91 = ssub.s32 %s15, %s22
      %p92 = scmp.eq.s32.totalorder %s91, 0
      %s94 = sadd.s32 %s93, 1
      %s95 = scalar_select %p92, %s93, %s94
      %p98 = pneg %p92
      %p99 = scmp.eq.s32.totalorder %s15, 1
      %p100 = por %p98, %p99
      %p101 = scmp.ne.s32.totalorder %s93, %s96
      %p102 = scmp.eq.s32.totalorder %s15, 0
      %p103 = por %p101, %p102
      %p104 = scmp.ne.s32.totalorder %s93, %s96
      %p105 = scmp.eq.s32.totalorder %s20, 1
      %p106 = por %p104, %p105
      %p107 = scmp.ne.s32.totalorder %s96, %s97
      %p108 = scmp.eq.s32.totalorder %s20, 0
      %p109 = por %p107, %p108
      %p110 = scmp.ne.s32.totalorder %s96, %s97
      %p111 = scmp.eq.s32.totalorder %s21, 1
      %p112 = por %p110, %p111
      %p114 = scmp.ne.s32.totalorder %s97, %s113
      %p115 = scmp.eq.s32.totalorder %s21, 0
      %p116 = por %p114, %p115
      %p117 = scmp.le.s32.totalorder 1, %s15
      %p118 = scmp.lt.s32.totalorder %s15, 3
      %p119 = pnand %p117, %p118
      %p120 = pneg %p119
      // Predicated region
      $region9: #{tpu_custom_call.1} parent=5 // pred_check
        _
      $region10: #{tpu_custom_call.1} parent=5 // pred_check_branch
        %122 = sbr.rel (%p119) target = $region12
      $region11: #{tpu_custom_call.1} parent=5 // pred_region
        %s123 = ssub.s32 %s15, 1
        // Predicated region
        $region13: #{tpu_custom_call.1} parent=11 // pred_check
          %p124 = pneg %p62
        $region14: #{tpu_custom_call.1} parent=11 // pred_check_branch
          %126 = sbr.rel (%p124) target = $region16
        $region15: #{tpu_custom_call.1} parent=11 // pred_region
          _
        $region16: #{tpu_custom_call.1} parent=11 // pred_fallthru
          _
        // Predicated region
        $region17: #{tpu_custom_call.1} parent=11 // pred_check
          %p127 = pneg %p83
        $region18: #{tpu_custom_call.1} parent=11 // pred_check_branch
          %129 = sbr.rel (%p127) target = $region20
        $region19: #{tpu_custom_call.1} parent=11 // pred_region
          _
        $region20: #{tpu_custom_call.1} parent=11 // pred_fallthru
          _
      $region12: #{tpu_custom_call.1} parent=5 // pred_fallthru
        _
      %p130 = scmp.lt.s32.totalorder %s15, 2
      // Predicated region
      $region21: #{tpu_custom_call.1} parent=5 // pred_check
        %p131 = pneg %p130
      $region22: #{tpu_custom_call.1} parent=5 // pred_check_branch
        %133 = sbr.rel (%p131) target = $region24
      $region23: #{tpu_custom_call.1} parent=5 // pred_region
        // Predicated region
        $region25: #{tpu_custom_call.1} parent=23 // pred_check
          %p134 = pneg %p35
        $region26: #{tpu_custom_call.1} parent=23 // pred_check_branch
          %136 = sbr.rel (%p134) target = $region28
        $region27: #{tpu_custom_call.1} parent=23 // pred_region
          %s137 = sand.u32 %s25, 1
          %s138 = scalar_lea.sflag [#allocation5], %s137
          %s139 = sand.u32 %s25, 1
          %s140 = smul.addr %s139, 8
          %s141 = scalar_lea.vmem [#allocation4], %s140
          %s143 = ssub.s32 128, 128
          %144 = vsyncadd %s138, %s143
          %s145 = smul.addr %s15, 2
          %s146 = smul.addr %s145, 64
          %s147 = scalar_lea.hbm %s0, %s146
          %s149 = sshll.u32 %s141, 4
          %s150 = int_to_ptr.vmem [resolvable:$true] %s149
          %152 = dma.hbm_to_vmem [thread:$0]  %s147, 128, %s150, %s138
        $region28: #{tpu_custom_call.1} parent=23 // pred_fallthru
          _
      $region24: #{tpu_custom_call.1} parent=5 // pred_fallthru
        _
      %p153 = scmp.le.s32.totalorder 1, %s15
      %p154 = scmp.lt.s32.totalorder %s15, 3
      %p155 = pnand %p153, %p154
      %p156 = pneg %p155
      // Predicated region
      $region29: #{tpu_custom_call.1} parent=5 // pred_check
        _
      $region30: #{tpu_custom_call.1} parent=5 // pred_check_branch
        %158 = sbr.rel (%p155) target = $region32
      $region31: #{tpu_custom_call.1} parent=5 // pred_region
        %s159 = ssub.s32 %s15, 1
        %s160 = sand.u32 %s28, 1
        %s161 = scalar_lea.sflag [#allocation5], %s160
        %s162 = sand.u32 %s28, 1
        %s163 = smul.addr %s162, 8
        %s164 = scalar_lea.vmem [#allocation4], %s163
        // Predicated region
        $region33: #{tpu_custom_call.1} parent=31 // pred_check
          %p165 = pneg %p41
        $region34: #{tpu_custom_call.1} parent=31 // pred_check_branch
          %167 = sbr.rel (%p165) target = $region36
        $region35: #{tpu_custom_call.1} parent=31 // pred_region
          %168 = dma.done %s161, 128
        $region36: #{tpu_custom_call.1} parent=31 // pred_fallthru
          _
        %s169 = sand.u32 %s28, 1
        %s170 = scalar_lea.sflag [#allocation5], %s169
        %s171 = sand.u32 %s28, 1
        %s172 = smul.addr %s171, 8
        %s173 = scalar_lea.vmem [#allocation4], %s172
        %p174 = pneg %p41
        %p175 = pneg %p38
        %p176 = pneg %p62
        %p177 = pneg %p59
        %p178 = pneg %p83
        %p179 = pneg %p80
        %p180 = pneg %p109
        %p181 = pneg %p106
        %s182 = sand.u32 %s96, 1
        %s183 = scalar_lea.sflag [#allocation6], %s182
        %s184 = sand.u32 %s96, 1
        %s185 = smul.addr %s184, 8
        %s186 = scalar_lea.vmem [#allocation7], %s185
        %v187 = vld [vmem:[%s164] sm:$0xff]
        %188 = vst [vmem:[#allocation2] sm:$0xff] 0.0
        %189 = vst [vmem:[#allocation2 + $0x8] sm:$0xff] 0.0
        %190 = vst [vmem:[#allocation2 + $0x4] sm:$0xff] %v187
        %v191 = vlaneseq
        %v192 = vand.u32 %v191, 127
        %v193 = vadd.s32 %v192, 128
        %vm194 = vcmp.lt.s32.totalorder %v192, 0
        %v195 = vsub.s32 0, %v192
        %v196 = vsel %vm194, %v195, %v192
        %v197 = vshrl.u32 %v196, 4
        %v198 = vand.u32 %v196, 15
        %v199 = vsub.s32 0, %v198
        %v200 = vsel %vm194, %v199, %v198
        %vm201 = vcmp.lt.s32.totalorder %v193, 0
        %v202 = vsub.s32 0, %v193
        %v203 = vsel %vm201, %v202, %v193
        %v204 = vshrl.u32 %v203, 4
        %v205 = vand.u32 %v203, 15
        %v206 = vsub.s32 0, %v205
        %v207 = vsel %vm201, %v206, %v205
        %vm208 = vcmp.ne.s32.totalorder %v200, 0
        %vm209 = vcmp.ne.s32.totalorder %v207, 0
        %vm210 = vcmp.lt.s32.totalorder %v200, 0
        %vm211 = vcmp.lt.s32.totalorder %v207, 0
        %vm212 = vmand %vm210, %vm208
        %vm213 = vmand %vm211, %vm209
        %v214 = vadd.s32 %v200, 16
        %v215 = vadd.s32 %v207, 16
        %v216 = vsel %vm212, %v214, %v200
        %v217 = vsel %vm213, %v215, %v207
        %v218 = vld [vmem:[#allocation2] sm:$0xff]
        %v219 = vld [vmem:[#allocation2 + $0x8] sm:$0xf]
        %vm220 = vcmp.ge.s32.totalorder %v216, 1
        %vm221 = vcmp.ge.s32.totalorder %v217, 1
        %v224 = vcombine.high %v218, %v218
        %225 = vrot.lane.b32.xlu0 %v218, 17
        %v226 = vpop.permute.xlu0 %225
        %227 = vrot.lane.b32.xlu0 %v224, 17
        %v228 = vpop.permute.xlu0 %227
        %229 = vrot.lane.b32.xlu0 %v219, 17
        %v230 = vpop.permute.xlu0 %229
        %vm231 = vcmask 138240
        %v232 = vsel %vm231, %v226, %v228
        %v233 = vsel %vm231, %v228, %v230
        %v236 = vsel %vm220, %v232, 0.0
        %v237 = vsel %vm221, %v233, 0.0
        %238 = vst [vmem:[#allocation3] sm:$0xf] %v236
        %239 = vst [vmem:[#allocation3 + $0x8] sm:$0xf] %v237
        %v240 = vld [vmem:[#allocation2] sm:$0xff]
        %v241 = vld [vmem:[#allocation2 + $0x8] sm:$0xf]
        %v244 = vcombine.low %v240, %v240
        %v245 = vcombine.low %v241, %v241
        %246 = vrot.lane.b32.xlu0 %v244, 16
        %v247 = vpop.permute.xlu0 %246
        %248 = vrot.lane.b32.xlu0 %v240, 16
        %v249 = vpop.permute.xlu0 %248
        %250 = vrot.lane.b32.xlu0 %v245, 16
        %v251 = vpop.permute.xlu0 %250
        %vm252 = vcmask 130048
        %v253 = vsel %vm252, %v247, %v249
        %v254 = vsel %vm252, %v249, %v251
        %257 = vst [vmem:[#allocation3] sm:$0xf0] %v253
        %258 = vst [vmem:[#allocation3 + $0x8] sm:$0xf0] %v254
        %v259 = vld [vmem:[#allocation2] sm:$0xff]
        %v260 = vld [vmem:[#allocation2 + $0x8] sm:$0xf]
        %vm261 = vcmp.le.s32.totalorder %v216, 14
        %vm262 = vcmp.le.s32.totalorder %v217, 14
        %v265 = vcombine.high %v259, %v259
        %266 = vrot.lane.b32.xlu0 %v259, 15
        %v267 = vpop.permute.xlu0 %266
        %268 = vrot.lane.b32.xlu0 %v265, 15
        %v269 = vpop.permute.xlu0 %268
        %270 = vrot.lane.b32.xlu0 %v260, 15
        %v271 = vpop.permute.xlu0 %270
        %vm272 = vcmask 121856
        %v273 = vsel %vm272, %v267, %v269
        %v274 = vsel %vm272, %v269, %v271
        %v277 = vsel %vm261, %v273, 0.0
        %v278 = vsel %vm262, %v274, 0.0
        %279 = vst [vmem:[#allocation3 + $0x10] sm:$0xf] %v277
        %280 = vst [vmem:[#allocation3 + $0x18] sm:$0xf] %v278
        %v281 = vld [vmem:[#allocation2] sm:$0xff]
        %v282 = vld [vmem:[#allocation2 + $0x8] sm:$0xf]
        %v285 = vcombine.high %v281, %v281
        %286 = vrot.lane.b32.xlu0 %v281, 1
        %v287 = vpop.permute.xlu0 %286
        %288 = vrot.lane.b32.xlu0 %v285, 1
        %v289 = vpop.permute.xlu0 %288
        %290 = vrot.lane.b32.xlu0 %v282, 1
        %v291 = vpop.permute.xlu0 %290
        %vm292 = vcmask 7168
        %v293 = vsel %vm292, %v287, %v289
        %v294 = vsel %vm292, %v289, %v291
        %v297 = vsel %vm220, %v293, 0.0
        %v298 = vsel %vm221, %v294, 0.0
        %v301 = vrot.slane %v297, 4
        %v302 = vrot.slane %v298, 4
        %305 = vst [vmem:[#allocation3 + $0x10] sm:$0xf0] %v301
        %306 = vst [vmem:[#allocation3 + $0x18] sm:$0xf0] %v302
        %v307 = vld [vmem:[#allocation2 + $0x4] sm:$0xff]
        %v309 = vcombine.high %v307, %v307
        %311 = vst [vmem:[#allocation3 + $0x20] sm:$0xf] %v307
        %312 = vst [vmem:[#allocation3 + $0x28] sm:$0xf] %v309
        %v313 = vld [vmem:[#allocation2 + $0x4] sm:$0xff]
        %v314 = vld [vmem:[#allocation2 + $0xc] sm:$0xf]
        %v317 = vcombine.high %v313, %v313
        %318 = vrot.lane.b32.xlu0 %v313, 127
        %v319 = vpop.permute.xlu0 %318
        %320 = vrot.lane.b32.xlu0 %v317, 127
        %v321 = vpop.permute.xlu0 %320
        %322 = vrot.lane.b32.xlu0 %v314, 127
        %v323 = vpop.permute.xlu0 %322
        %vm324 = vcmask 1039360
        %v325 = vsel %vm324, %v319, %v321
        %v326 = vsel %vm324, %v321, %v323
        %v329 = vsel %vm261, %v325, 0.0
        %v330 = vsel %vm262, %v326, 0.0
        %v333 = vrot.slane %v329, 4
        %v334 = vrot.slane %v330, 4
        %337 = vst [vmem:[#allocation3 + $0x20] sm:$0xf0] %v333
        %338 = vst [vmem:[#allocation3 + $0x28] sm:$0xf0] %v334
        %v339 = vld [vmem:[#allocation2 + $0x4] sm:$0xff]
        %v340 = vld [vmem:[#allocation2 + $0xc] sm:$0xf]
        %v343 = vcombine.high %v339, %v339
        %344 = vrot.lane.b32.xlu0 %v339, 113
        %v345 = vpop.permute.xlu0 %344
        %346 = vrot.lane.b32.xlu0 %v343, 113
        %v347 = vpop.permute.xlu0 %346
        %348 = vrot.lane.b32.xlu0 %v340, 113
        %v349 = vpop.permute.xlu0 %348
        %vm350 = vcmask 924672
        %v351 = vsel %vm350, %v345, %v347
        %v352 = vsel %vm350, %v347, %v349
        %v355 = vsel %vm220, %v351, 0.0
        %v356 = vsel %vm221, %v352, 0.0
        %357 = vst [vmem:[#allocation3 + $0x30] sm:$0xf] %v355
        %358 = vst [vmem:[#allocation3 + $0x38] sm:$0xf] %v356
        %v359 = vld [vmem:[#allocation2 + $0x4] sm:$0xff]
        %v360 = vld [vmem:[#allocation2 + $0xc] sm:$0xf]
        %v363 = vcombine.low %v359, %v359
        %v364 = vcombine.low %v360, %v360
        %365 = vrot.lane.b32.xlu0 %v363, 112
        %v366 = vpop.permute.xlu0 %365
        %367 = vrot.lane.b32.xlu0 %v359, 112
        %v368 = vpop.permute.xlu0 %367
        %369 = vrot.lane.b32.xlu0 %v364, 112
        %v370 = vpop.permute.xlu0 %369
        %vm371 = vcmask 916480
        %v372 = vsel %vm371, %v366, %v368
        %v373 = vsel %vm371, %v368, %v370
        %376 = vst [vmem:[#allocation3 + $0x30] sm:$0xf0] %v372
        %377 = vst [vmem:[#allocation3 + $0x38] sm:$0xf0] %v373
        %v378 = vld [vmem:[#allocation2 + $0x4] sm:$0xff]
        %v379 = vld [vmem:[#allocation2 + $0xc] sm:$0xf]
        %v382 = vcombine.high %v378, %v378
        %383 = vrot.lane.b32.xlu0 %v378, 111
        %v384 = vpop.permute.xlu0 %383
        %385 = vrot.lane.b32.xlu0 %v382, 111
        %v386 = vpop.permute.xlu0 %385
        %387 = vrot.lane.b32.xlu0 %v379, 111
        %v388 = vpop.permute.xlu0 %387
        %vm389 = vcmask 908288
        %v390 = vsel %vm389, %v384, %v386
        %v391 = vsel %vm389, %v386, %v388
        %v394 = vsel %vm261, %v390, 0.0
        %v395 = vsel %vm262, %v391, 0.0
        %396 = vst [vmem:[#allocation3 + $0x40] sm:$0xf] %v394
        %397 = vst [vmem:[#allocation3 + $0x48] sm:$0xf] %v395
        %v398 = vld [vmem:[%s1] sm:$0xf]
        %v399 = vld [vmem:[#allocation3] sm:$0xff]
        %v400 = vld [vmem:[#allocation3 + $0x8] sm:$0xff]
        %v401 = vld [vmem:[#allocation3 + $0x10] sm:$0xff]
        %v402 = vld [vmem:[#allocation3 + $0x18] sm:$0xff]
        %v403 = vld [vmem:[#allocation3 + $0x20] sm:$0xff]
        %v404 = vld [vmem:[#allocation3 + $0x28] sm:$0xff]
        %v405 = vld [vmem:[#allocation3 + $0x30] sm:$0xff]
        %v406 = vld [vmem:[#allocation3 + $0x38] sm:$0xff]
        %v407 = vld [vmem:[#allocation3 + $0x40] sm:$0xf]
        %v408 = vld [vmem:[#allocation3 + $0x48] sm:$0xf]
        %v409 = vld [vmem:[%s2] sm:$0xf]
        %411 = vset.pattern.permute.xlu0 0
        %412 = vperm.xlu0 %411, %v409
        %v413 = vpop.permute.xlu0 %412
        %vm415 = vcmask 293888
        %v417 = vsel %vm415, %v398, 0
        %vm419 = vcmask 1043456
        %v421 = vsel %vm419, %v407, 0
        %v424 = vsel %vm419, %v408, 0
        %426 = vmatprep.subr.mxu0 %v400
        %427 = vmatpush1.msra.mxu0 %v399
        %428 = vmatprep.subr.mxu0 %v402
        %429 = vmatpush1.msra.mxu0 %v401
        %430 = vmatprep.subr.mxu0 %v404
        %431 = vmatpush1.msra.mxu0 %v403
        %432 = vmatprep.subr.mxu0 %v406
        %433 = vmatpush1.msra.mxu0 %v405
        %434 = vmatprep.subr.mxu0 %v424
        %435 = vmatpush1.msra.mxu0 %v421
        %436 = vmatprep.subr.mxu0 0.0
        %437 = vmatpush1.msra.mxu0 0.0
        %438 = vmatprep.subr.mxu0 0.0
        %439 = vmatpush1.msra.mxu0 0.0
        %440 = vmatprep.subr.mxu0 0.0
        %441 = vmatpush1.msra.mxu0 0.0
        %442 = vmatprep.subr.mxu0 0.0
        %443 = vmatpush1.msra.mxu0 0.0
        %444 = vmatprep.subr.mxu0 0.0
        %445 = vmatpush1.msra.mxu0 0.0
        %446 = vmatprep.subr.mxu0 0.0
        %447 = vmatpush1.msra.mxu0 0.0
        %448 = vmatprep.subr.mxu0 0.0
        %449 = vmatpush1.msra.mxu0 0.0
        %450 = vmatprep.subr.mxu0 0.0
        %451 = vmatpush1.msra.mxu0 0.0
        %452 = vmatprep.subr.mxu0 0.0
        %453 = vmatpush1.msra.mxu0 0.0
        %454 = vmatprep.subr.mxu0 0.0
        %455 = vmatpush1.msra.mxu0 0.0
        %456 = vmatprep.subr.mxu0 0.0
        %457 = vmatpush1.msra.mxu0 0.0
        %458 = vmatprep.subr.mxu0 0.0
        %459 = vmatpush1.msra.mxu0 0.0
        %460 = vmatprep.subr.mxu0 0.0
        %461 = vmatpush1.msra.mxu0 0.0
        %462 = vmatprep.subr.mxu0 0.0
        %463 = vmatpush1.msra.mxu0 0.0
        %464 = vmatprep.subr.mxu0 0.0
        %465 = vmatpush1.msra.mxu0 0.0
        %466 = vmatprep.subr.mxu0 0.0
        %467 = vmatpush1.msra.mxu0 0.0
        %468 = vmatprep.subr.mxu0 0.0
        %469 = vmatpush1.msra.mxu0 0.0
        %470 = vmatprep.subr.mxu0 0.0
        %471 = vmatpush1.msra.mxu0 0.0
        %472 = vmatprep.subr.mxu0 0.0
        %473 = vmatpush1.msra.mxu0 0.0
        %474 = vmatprep.subr.mxu0 0.0
        %475 = vmatpush1.msra.mxu0 0.0
        %476 = vmatprep.subr.mxu0 0.0
        %477 = vmatpush1.msra.mxu0 0.0
        %478 = vmatprep.subr.mxu0 0.0
        %479 = vmatpush1.msra.mxu0 0.0
        %480 = vmatprep.subr.mxu0 0.0
        %481 = vmatpush1.msra.mxu0 0.0
        %482 = vmatprep.subr.mxu0 0.0
        %483 = vmatpush1.msra.mxu0 0.0
        %484 = vmatprep.subr.mxu0 0.0
        %485 = vmatpush1.msra.mxu0 0.0
        %486 = vmatprep.subr.mxu0 0.0
        %487 = vmatpush1.msra.mxu0 0.0
        %488 = vmatprep.subr.mxu0 0.0
        %489 = vmatpush1.msra.mxu0 0.0
        %490 = vmatprep.mubr.f32.mxu0 0.0
        %491 = vmatmul.mubr.f32.gmra.mrb[0].mxu0 %v417
        %v492 = vpop.f32.mrb[0].mxu0
        %v493 = vadd.f32 %v413, %v492
        %v494 = vpop.f32.mrb[0].mxu0
        %v495 = vadd.f32 %v413, %v494
        %496 = vdwg.mxu0
        %v497 = vmax.f32 %v493, 0.0
        %v498 = vmax.f32 %v495, 0.0
        %v499 = vmul.f32 %v497, 0.1
        %v500 = vmul.f32 %v498, 0.1
        %v503 = vcombine.low %v499, %v500
        %v505 = vadd.f32 %v187, %v503
        %506 = vst [vmem:[%s186] sm:$0xff] %v505
        %s507 = sand.u32 %s96, 1
        %s508 = scalar_lea.sflag [#allocation6], %s507
        %s509 = sand.u32 %s96, 1
        %s510 = smul.addr %s509, 8
        %s511 = scalar_lea.vmem [#allocation7], %s510
        // Predicated region
        $region37: #{tpu_custom_call.1} parent=31 // pred_check
          %p512 = pneg %p106
        $region38: #{tpu_custom_call.1} parent=31 // pred_check_branch
          %514 = sbr.rel (%p512) target = $region40
        $region39: #{tpu_custom_call.1} parent=31 // pred_region
          %s516 = ssub.s32 128, 128
          %517 = vsyncadd %s508, %s516
          %s518 = smul.addr %s20, 2
          %s519 = smul.addr %s518, 64
          %s520 = scalar_lea.hbm %s3, %s519
          %s522 = sshll.u32 %s511, 4
          %s523 = int_to_ptr.vmem [resolvable:$true] %s522
          %525 = dma.vmem_to_hbm [thread:$0]  %s523, 128, %s520, %s508
        $region40: #{tpu_custom_call.1} parent=31 // pred_fallthru
          _
      $region32: #{tpu_custom_call.1} parent=5 // pred_fallthru
        _
      %p526 = scmp.le.s32.totalorder 2, %s15
      // Predicated region
      $region41: #{tpu_custom_call.1} parent=5 // pred_check
        %p527 = pneg %p526
      $region42: #{tpu_custom_call.1} parent=5 // pred_check_branch
        %529 = sbr.rel (%p527) target = $region44
      $region43: #{tpu_custom_call.1} parent=5 // pred_region
        %s530 = ssub.s32 %s15, 2
        // Predicated region
        $region45: #{tpu_custom_call.1} parent=43 // pred_check
          %p531 = pneg %p112
        $region46: #{tpu_custom_call.1} parent=43 // pred_check_branch
          %533 = sbr.rel (%p531) target = $region48
        $region47: #{tpu_custom_call.1} parent=43 // pred_region
          %s534 = sand.u32 %s97, 1
          %s535 = scalar_lea.sflag [#allocation6], %s534
          %s536 = sand.u32 %s97, 1
          %s537 = smul.addr %s536, 8
          %s538 = scalar_lea.vmem [#allocation7], %s537
          %539 = dma.done %s535, 128
        $region48: #{tpu_custom_call.1} parent=43 // pred_fallthru
          _
      $region44: #{tpu_custom_call.1} parent=5 // pred_fallthru
        _
    $region6: #{tpu_custom_call.1} parent=1 // loop_footer
      %s19 = sadd.s32 1, %s15
    $region7: #{tpu_custom_call.1} parent=1 // loop_footer_branch
      %14 = sbr.rel target = $region3
    $region8: #{tpu_custom_call.1} parent=1 // loop_exit
      _
    %540 = vsyncpa [#allocation5], 1
    %s541 = scalar_lea.sflag [#allocation5], 1
    %542 = vsyncpa %s541, 1
    %543 = vsyncpa [#allocation6], 1
    %s544 = scalar_lea.sflag [#allocation6], 1
    %545 = vsyncpa %s544, 1

</llo_original>
